<compile_context>
chip_gen: v7x
topology: tpu7x:2x2x1
jax: 0.10.0
libtpu: 0.0.40
codegen_flags: <defaults>
</compile_context>

<pallas_src>
import functools

import jax
import jax.numpy as jnp
from jax import lax
from jax.experimental import pallas as pl
from jax.experimental.pallas import tpu as pltpu

LN_EPS = 1e-12                      # pytorchic-bert LayerNorm variance_epsilon


@functools.lru_cache(maxsize=None)
def _vmem_limit_bytes():
    """Per-generation VMEM budget: ~85% of physical, capped at 112 MiB."""
    cap = 64 * 1024 * 1024
    try:
        cap = int(pltpu.get_tpu_info().vmem_capacity_bytes)
    except Exception:
        pass  # fall back to a limit that is safe on every generation
    return max(32 * 1024 * 1024, min(int(cap * 0.85), 112 * 1024 * 1024))


def _layer_norm(x, gamma, beta):
    # f32 elementwise path (keep VPU math in f32 on all generations).
    mu = jnp.mean(x, axis=-1, keepdims=True)
    var = jnp.mean(jnp.square(x - mu), axis=-1, keepdims=True)
    return (x - mu) * lax.rsqrt(var + LN_EPS) * gamma + beta


def _seq_tile(S, target):
    """Row-tile size along the sequence axis (<= target, divides S, mult. of 8)."""
    if S <= target:
        return S
    t = target
    while t >= 8:
        if S % t == 0:
            ts = t
            break
        t -= 8
    else:
        ts = S
    assert ts == S or (ts % 8 == 0 and S % ts == 0), (S, ts)
    return ts


def _rep(shape):
    """BlockSpec for a grid-invariant (replicated / resident) operand."""
    n = len(shape)
    return pl.BlockSpec(shape, lambda *args, _n=n: (0,) * _n)


# --------------------------------------------------------------------------
# Kernel 1: embedding sum + LayerNorm  ((tok+seg) + pos -> LN), grid (B, S//ts)
# --------------------------------------------------------------------------
def embed_ln_kernel(emb_ref, pos_ref, gamma_ref, beta_ref, out_ref):
    e = emb_ref[0].astype(jnp.float32) + pos_ref[...].astype(jnp.float32)
    out_ref[0] = _layer_norm(e, gamma_ref[...], beta_ref[...]).astype(out_ref.dtype)
    # dropout after embedding LN: identity in eval mode


def embed_layernorm(tok_seg, pos, gamma, beta):
    B, S, D = tok_seg.shape
    ts = _seq_tile(S, target=512)
    ns = S // ts
    return pl.pallas_call(
        embed_ln_kernel,
        grid=(B, ns),
        in_specs=[
            pl.BlockSpec((1, ts, D), lambda b, s: (b, s, 0)),   # tok+seg
            pl.BlockSpec((ts, D), lambda b, s: (s, 0)),         # pos (S, D)
            _rep((1, D)), _rep((1, D)),                         # gamma, beta
        ],
        out_specs=pl.BlockSpec((1, ts, D), lambda b, s: (b, s, 0)),
        out_shape=jax.ShapeDtypeStruct((B, S, D), jnp.bfloat16),
        compiler_params=pltpu.CompilerParams(
            dimension_semantics=("parallel", "parallel"),
            vmem_limit_bytes=_vmem_limit_bytes()),
    )(tok_seg, pos, gamma, beta)


# --------------------------------------------------------------------------
# Kernel 2: multi-head attention + output projection + residual + LN1
#           grid (B, S//tq) query tiles; K/V full-resident per batch element
# --------------------------------------------------------------------------
def attention_kernel(hq_ref, hkv_ref, bias_ref,
                     wqkv_ref, bqkv_ref, wo_ref, bo_ref, g1_ref, be1_ref,
                     out_ref, ctx_ref, *, n_heads):
    hq = hq_ref[0]                     # (tq, D) bf16 — query / residual rows
    hkv = hkv_ref[0]                   # (S, D)  bf16 — full sequence for K/V
    tq, D = hq.shape
    S = hkv.shape[0]
    dh = D // n_heads
    scale = 1.0 / float(dh) ** 0.5

    # Fused projections, f32 accumulation; 1/sqrt(dh) folded into q once and
    # q/k/v cast to bf16 once (before the per-head loop).
    q = jnp.dot(hq, wqkv_ref[:, :D], preferred_element_type=jnp.float32)
    q = ((q + bqkv_ref[:, :D]) * scale).astype(jnp.bfloat16)
    kv = jnp.dot(hkv, wqkv_ref[:, D:], preferred_element_type=jnp.float32)
    kv = (kv + bqkv_ref[:, D:]).astype(jnp.bfloat16)
    k = kv[:, :D]
    v = kv[:, D:]

    # Additive key-mask bias, broadcast hoisted out of the unrolled head loop.
    bias = jnp.broadcast_to(bias_ref[0], (tq, S))            # (tq, S) f32

    # TODO(synk): per-head dh-wide lane slices are not 128-aligned for dh<128;
    # a batched (n_heads, S, dh) layout would remove the relayout traffic.
    for hd in range(n_heads):
        sl = slice(hd * dh, (hd + 1) * dh)
        # q @ k^T as an NT matmul (no explicit transpose materialized).
        scores = lax.dot_general(q[:, sl], k[:, sl], (((1,), (1,)), ((), ())),
                                 preferred_element_type=jnp.float32)
        scores = scores + bias
        scores = scores - jnp.max(scores, axis=-1, keepdims=True)
        p = jnp.exp(scores)
        p = p * pl.reciprocal(jnp.sum(p, axis=-1, keepdims=True), approx=True)
        # attention-prob dropout: identity in eval mode
        ctx_ref[:, sl] = jnp.dot(p.astype(jnp.bfloat16), v[:, sl],
                                 preferred_element_type=jnp.float32
                                 ).astype(jnp.bfloat16)

    # Single full-depth (K=D) output projection over the assembled heads.
    attn = jnp.dot(ctx_ref[...], wo_ref[...],
                   preferred_element_type=jnp.float32) + bo_ref[...]
    h1 = _layer_norm(hq.astype(jnp.float32) + attn, g1_ref[...], be1_ref[...])
    out_ref[0] = h1.astype(out_ref.dtype)


def attention_block(h, bias3, lp, n_heads):
    B, S, D = h.shape
    tq = _seq_tile(S, target=256)
    nq = S // tq
    in_specs = [
        pl.BlockSpec((1, tq, D), lambda b, s: (b, s, 0)),   # h (query rows)
        pl.BlockSpec((1, S, D), lambda b, s: (b, 0, 0)),    # h (full seq, K/V)
        pl.BlockSpec((1, 1, S), lambda b, s: (b, 0, 0)),    # mask bias
        _rep((D, 3 * D)), _rep((1, 3 * D)),                 # wqkv, bqkv
        _rep((D, D)), _rep((1, D)),                         # wo, bo
        _rep((1, D)), _rep((1, D)),                         # g1, be1
    ]
    return pl.pallas_call(
        functools.partial(attention_kernel, n_heads=n_heads),
        grid=(B, nq),
        in_specs=in_specs,
        out_specs=pl.BlockSpec((1, tq, D), lambda b, s: (b, s, 0)),
        out_shape=jax.ShapeDtypeStruct((B, S, D), jnp.bfloat16),
        scratch_shapes=[pltpu.VMEM((tq, D), jnp.bfloat16)],   # assembled heads
        compiler_params=pltpu.CompilerParams(
            dimension_semantics=("parallel", "parallel"),
            vmem_limit_bytes=_vmem_limit_bytes()),
    )(h, h, bias3,
      lp["wqkv"], lp["bqkv"], lp["wo"], lp["bo"], lp["g1"], lp["be1"])


# --------------------------------------------------------------------------
# Kernel 3: FFN + residual + LN2, grid (B, S//tq) row tiles
# --------------------------------------------------------------------------
def ffn_kernel(h_ref, w1_ref, b1_ref, w2_ref, b2_ref, g2_ref, be2_ref, out_ref):
    x = h_ref[0]                       # (tq, D) bf16
    ff = jnp.dot(x, w1_ref[...], preferred_element_type=jnp.float32) + b1_ref[...]
    # TODO(synk): pytorchic-bert uses exact erf GELU; tanh approximation used here.
    ff = jax.nn.gelu(ff, approximate=True)
    ff = jnp.dot(ff.astype(jnp.bfloat16), w2_ref[...],
                 preferred_element_type=jnp.float32) + b2_ref[...]
    out_ref[0] = _layer_norm(x.astype(jnp.float32) + ff,
                             g2_ref[...], be2_ref[...]).astype(out_ref.dtype)


def ffn_block(h1, lp):
    B, S, D = h1.shape
    F = lp["w1"].shape[1]
    tq = _seq_tile(S, target=512)
    ns = S // tq
    in_specs = [
        pl.BlockSpec((1, tq, D), lambda b, s: (b, s, 0)),  # h1 row tile
        _rep((D, F)), _rep((1, F)),                        # w1, b1
        _rep((F, D)), _rep((1, D)),                        # w2, b2
        _rep((1, D)), _rep((1, D)),                        # g2, be2
    ]
    return pl.pallas_call(
        ffn_kernel,
        grid=(B, ns),
        in_specs=in_specs,
        out_specs=pl.BlockSpec((1, tq, D), lambda b, s: (b, s, 0)),
        out_shape=jax.ShapeDtypeStruct((B, S, D), jnp.bfloat16),
        compiler_params=pltpu.CompilerParams(
            dimension_semantics=("parallel", "parallel"),
            vmem_limit_bytes=_vmem_limit_bytes()),
    )(h1, lp["w1"], lp["b1"], lp["w2"], lp["b2"], lp["g2"], lp["be2"])


# --------------------------------------------------------------------------
# Kernel 4: classification head  tanh(h0 @ Wp + bp) @ Wc + bc
# --------------------------------------------------------------------------
def head_kernel(h0_ref, wp_ref, bp_ref, wc_ref, bc_ref, out_ref):
    pooled = jnp.tanh(
        jnp.dot(h0_ref[...], wp_ref[...], preferred_element_type=jnp.float32)
        + bp_ref[...])
    # TODO(synk): hidden dropout implemented as eval-mode identity (no RNG masking).
    out_ref[...] = (
        jnp.dot(pooled.astype(jnp.bfloat16), wc_ref[...],
                preferred_element_type=jnp.float32)
        + bc_ref[...])


def classification_head(h0, wp, bp, wc, bc):
    B, _ = h0.shape
    C = wc.shape[1]
    return pl.pallas_call(
        head_kernel,
        out_shape=jax.ShapeDtypeStruct((B, C), jnp.float32),
        compiler_params=pltpu.CompilerParams(
            vmem_limit_bytes=_vmem_limit_bytes()),
    )(h0, wp, bp, wc, bc)


# --------------------------------------------------------------------------
# Full forward pass (glue in plain JAX: embedding gathers, layer loop, slicing)
# --------------------------------------------------------------------------
def transformer_for_classification(params, input_ids, segment_ids=None,
                                   input_mask=None, *, n_heads):
    if segment_ids is None:
        segment_ids = jnp.zeros_like(input_ids)
    if input_mask is None:
        input_mask = jnp.ones_like(input_ids)

    B, S = input_ids.shape

    # Token+segment gathers fused by XLA into a single (B,S,D) bf16 producer.
    # TODO(synk): a full in-kernel DMA gather (scalar-prefetch ids + HBM tables)
    # would also remove this (B,S,D) HBM round trip.
    tok_seg = params["tok_emb"][input_ids] + params["seg_emb"][segment_ids]
    pos = params["pos_emb"][:S]                 # (S, D) bf16 — broadcast in-kernel

    h = embed_layernorm(tok_seg, pos, params["emb_gamma"], params["emb_beta"])

    # Additive attention-mask bias, computed once (hoisted out of the kernels).
    bias3 = (-10000.0 * (1.0 - input_mask.astype(jnp.float32))).reshape(B, 1, S)

    for lp in params["layers"]:
        h = attention_block(h, bias3, lp, n_heads)
        h = ffn_block(h, lp)

    h0 = h[:, 0]                                # (B, D) = h[:, 0]
    logits = classification_head(h0, params["pooler_w"], params["pooler_b"],
                                 params["cls_w"], params["cls_b"])
    return logits


# --------------------------------------------------------------------------
# Deterministic parameter init (bf16 weights, f32 biases / LN params)
# --------------------------------------------------------------------------
def init_params(key, *, vocab_size, max_len, n_segments, dim, dim_ff,
                n_layers, num_classes):
    keys = jax.random.split(key, 5 + n_layers)

    def dense(k, shape):
        return (0.02 * jax.random.normal(k, shape)).astype(jnp.bfloat16)

    params = {
        "tok_emb": dense(keys[0], (vocab_size, dim)),
        "pos_emb": dense(keys[1], (max_len, dim)),
        "seg_emb": dense(keys[2], (n_segments, dim)),
        "emb_gamma": jnp.ones((1, dim), jnp.float32),
        "emb_beta": jnp.zeros((1, dim), jnp.float32),
        "layers": [],
    }
    for i in range(n_layers):
        lk = jax.random.split(keys[3 + i], 6)
        wq = dense(lk[0], (dim, dim))
        wk = dense(lk[1], (dim, dim))
        wv = dense(lk[2], (dim, dim))
        params["layers"].append({
            # Fused QKV weight/bias prepared once at param-init time.
            "wqkv": jnp.concatenate([wq, wk, wv], axis=1),       # (D, 3D) bf16
            "bqkv": jnp.zeros((1, 3 * dim), jnp.float32),
            "wo": dense(lk[3], (dim, dim)), "bo": jnp.zeros((1, dim), jnp.float32),
            "g1": jnp.ones((1, dim), jnp.float32),
            "be1": jnp.zeros((1, dim), jnp.float32),
            "w1": dense(lk[4], (dim, dim_ff)),
            "b1": jnp.zeros((1, dim_ff), jnp.float32),
            "w2": dense(lk[5], (dim_ff, dim)),
            "b2": jnp.zeros((1, dim), jnp.float32),
            "g2": jnp.ones((1, dim), jnp.float32),
            "be2": jnp.zeros((1, dim), jnp.float32),
        })
    params["pooler_w"] = dense(keys[3 + n_layers], (dim, dim))
    params["pooler_b"] = jnp.zeros((1, dim), jnp.float32)
    params["cls_w"] = dense(keys[4 + n_layers], (dim, num_classes))
    params["cls_b"] = jnp.zeros((1, num_classes), jnp.float32)
    return params


if __name__ == "__main__":
    key = jax.random.PRNGKey(0)
    pkey, idkey, segkey = jax.random.split(key, 3)

    B, S = 2, 8
    cfg = dict(vocab_size=50, max_len=16, n_segments=2,
               dim=32, dim_ff=64, n_layers=2, n_heads=2)
    num_classes = 7

    params = init_params(
        pkey,
        vocab_size=cfg["vocab_size"], max_len=cfg["max_len"],
        n_segments=cfg["n_segments"], dim=cfg["dim"], dim_ff=cfg["dim_ff"],
        n_layers=cfg["n_layers"], num_classes=num_classes)

    input_ids = jax.random.randint(idkey, (B, S), 0, cfg["vocab_size"],
                                   dtype=jnp.int32)
    segment_ids = jax.random.randint(segkey, (B, S), 0, cfg["n_segments"],
                                     dtype=jnp.int32)
    input_mask = jnp.ones((B, S), dtype=jnp.int32)

    logits = transformer_for_classification(
        params, input_ids, segment_ids, input_mask, n_heads=cfg["n_heads"])
    logits = jax.block_until_ready(logits)
    assert logits.shape == (B, num_classes), logits.shape
    assert jnp.all(jnp.isfinite(logits))
    print("KERNEL_OK")
</pallas_src>

<mosaic_0001>
module attributes {stable_mosaic.version = 11 : i64} {
  func.func @embed_ln_kernel(%arg0: i32, %arg1: i32, %arg2: memref<1x8x32xbf16, #tpu.memory_space<vmem>>, %arg3: memref<8x32xbf16, #tpu.memory_space<vmem>>, %arg4: memref<1x32xf32, #tpu.memory_space<vmem>>, %arg5: memref<1x32xf32, #tpu.memory_space<vmem>>, %arg6: memref<1x8x32xbf16, #tpu.memory_space<vmem>>) attributes {dimension_semantics = [#tpu.dimension_semantics<parallel>, #tpu.dimension_semantics<parallel>], iteration_bounds = array<i64: 2, 1>, scalar_prefetch = 0 : i64, scratch_operands = 0 : i64, tpu.core_type = #tpu.core_type<tc>, window_params = [{transform_indices = @transform_0, window_bounds = array<i64: 1, 8, 32>}, {transform_indices = @transform_1, window_bounds = array<i64: 8, 32>}, {pipeline_mode = #tpu.pipeline_mode<synchronous>, transform_indices = @transform_2, window_bounds = array<i64: 1, 32>}, {pipeline_mode = #tpu.pipeline_mode<synchronous>, transform_indices = @transform_3, window_bounds = array<i64: 1, 32>}, {transform_indices = @transform_4, window_bounds = array<i64: 1, 8, 32>}]} {
    %c0 = arith.constant 0 : index
    %c0_0 = arith.constant 0 : index
    %c0_1 = arith.constant 0 : index
    %0 = vector.load %arg2[%c0, %c0_0, %c0_1] : memref<1x8x32xbf16, #tpu.memory_space<vmem>>, vector<1x8x32xbf16>
    %1 = vector.shape_cast %0 : vector<1x8x32xbf16> to vector<8x32xbf16>
    %2 = arith.extf %1 : vector<8x32xbf16> to vector<8x32xf32>
    %c0_2 = arith.constant 0 : index
    %c0_3 = arith.constant 0 : index
    %3 = vector.load %arg3[%c0_2, %c0_3] : memref<8x32xbf16, #tpu.memory_space<vmem>>, vector<8x32xbf16>
    %4 = arith.extf %3 : vector<8x32xbf16> to vector<8x32xf32>
    %5 = arith.addf %2, %4 : vector<8x32xf32>
    %c0_4 = arith.constant 0 : index
    %c0_5 = arith.constant 0 : index
    %6 = vector.load %arg4[%c0_4, %c0_5] : memref<1x32xf32, #tpu.memory_space<vmem>>, vector<1x32xf32>
    %c0_6 = arith.constant 0 : index
    %c0_7 = arith.constant 0 : index
    %7 = vector.load %arg5[%c0_6, %c0_7] : memref<1x32xf32, #tpu.memory_space<vmem>>, vector<1x32xf32>
    %cst = arith.constant dense<0.000000e+00> : vector<8xf32>
    %8 = vector.multi_reduction <add>, %5, %cst [1] : vector<8x32xf32> to vector<8xf32>
    %9 = vector.shape_cast %8 : vector<8xf32> to vector<8x1xf32>
    %cst_8 = arith.constant 3.200000e+01 : f32
    %10 = vector.broadcast %cst_8 : f32 to vector<8x1xf32>
    %11 = arith.divf %9, %10 : vector<8x1xf32>
    %12 = vector.broadcast %11 : vector<8x1xf32> to vector<8x32xf32>
    %13 = arith.subf %5, %12 : vector<8x32xf32>
    %14 = arith.mulf %13, %13 : vector<8x32xf32>
    %cst_9 = arith.constant dense<0.000000e+00> : vector<8xf32>
    %15 = vector.multi_reduction <add>, %14, %cst_9 [1] : vector<8x32xf32> to vector<8xf32>
    %16 = vector.shape_cast %15 : vector<8xf32> to vector<8x1xf32>
    %cst_10 = arith.constant 3.200000e+01 : f32
    %17 = vector.broadcast %cst_10 : f32 to vector<8x1xf32>
    %18 = arith.divf %16, %17 : vector<8x1xf32>
    %19 = vector.broadcast %11 : vector<8x1xf32> to vector<8x32xf32>
    %20 = arith.subf %5, %19 : vector<8x32xf32>
    %cst_11 = arith.constant 9.99999996E-13 : f32
    %21 = vector.broadcast %cst_11 : f32 to vector<8x1xf32>
    %22 = arith.addf %18, %21 : vector<8x1xf32>
    %23 = math.rsqrt %22 : vector<8x1xf32>
    %24 = vector.broadcast %23 : vector<8x1xf32> to vector<8x32xf32>
    %25 = arith.mulf %20, %24 : vector<8x32xf32>
    %26 = vector.broadcast %6 : vector<1x32xf32> to vector<8x32xf32>
    %27 = arith.mulf %25, %26 : vector<8x32xf32>
    %28 = vector.broadcast %7 : vector<1x32xf32> to vector<8x32xf32>
    %29 = arith.addf %27, %28 : vector<8x32xf32>
    %30 = arith.truncf %29 : vector<8x32xf32> to vector<8x32xbf16>
    %c0_12 = arith.constant 0 : index
    %c0_13 = arith.constant 0 : index
    %c0_14 = arith.constant 0 : index
    %31 = vector.load %arg6[%c0_12, %c0_13, %c0_14] : memref<1x8x32xbf16, #tpu.memory_space<vmem>>, vector<1x8x32xbf16>
    %32 = vector.shape_cast %31 : vector<1x8x32xbf16> to vector<8x32xbf16>
    %33 = vector.shape_cast %30 : vector<8x32xbf16> to vector<1x8x32xbf16>
    tpu.vector_store %arg6[%c0_12, %c0_13, %c0_14], %33 {strides = array<i32>} : memref<1x8x32xbf16, #tpu.memory_space<vmem>>, vector<1x8x32xbf16>,
    return
  }
  func.func @transform_0(%arg0: i32, %arg1: i32) -> (i32, i32, i32) {
    %c0_i32 = arith.constant 0 : i32
    %c0_i32_0 = arith.constant 0 : i32
    return %arg0, %arg1, %c0_i32 : i32, i32, i32
  }
  func.func @transform_1(%arg0: i32, %arg1: i32) -> (i32, i32) {
    %c0_i32 = arith.constant 0 : i32
    %c0_i32_0 = arith.constant 0 : i32
    return %arg1, %c0_i32 : i32, i32
  }
  func.func @transform_2(%arg0: i32, %arg1: i32) -> (i32, i32) {
    %c0_i32 = arith.constant 0 : i32
    %c0_i32_0 = arith.constant 0 : i32
    %c0_i32_1 = arith.constant 0 : i32
    return %c0_i32, %c0_i32_0 : i32, i32
  }
  func.func @transform_3(%arg0: i32, %arg1: i32) -> (i32, i32) {
    %c0_i32 = arith.constant 0 : i32
    %c0_i32_0 = arith.constant 0 : i32
    %c0_i32_1 = arith.constant 0 : i32
    return %c0_i32, %c0_i32_0 : i32, i32
  }
  func.func @transform_4(%arg0: i32, %arg1: i32) -> (i32, i32, i32) {
    %c0_i32 = arith.constant 0 : i32
    %c0_i32_0 = arith.constant 0 : i32
    return %arg0, %arg1, %c0_i32 : i32, i32, i32
  }
}

</mosaic_0001>

<llo_original>
// kernel: tpu_custom_call.1
$region0: #{tpu_custom_call.1}
  #allocation0 [shape = 'u32[]', space=smem, size = 0x4, offset = 0x4, fixed_abs, tag = 'smem constant byte address 0x4 - core index']
  #allocation1 [shape = 'u32[144,128]{1,0:T(1,128)}', space=vmem, size = 0x12000, scoped, tag = 'internal scratch']
  %s0 = inlined_call_operand.hbm [shape: bf16[2,8,32], index: 0, kind: input, shape index: {}]
  %s1 = inlined_call_operand.hbm [shape: bf16[8,32], index: 1, kind: input, shape index: {}]
  %s2 = inlined_call_operand.vmem [shape: f32[1,32], index: 2, kind: input, shape index: {}]
  %s3 = inlined_call_operand.vmem [shape: f32[1,32], index: 3, kind: input, shape index: {}]
  %s4 = inlined_call_operand.hbm [shape: bf16[2,8,32], index: 4, kind: output, shape index: {}]
  %s5 = sld [smem:[#allocation0]]
  $region57: #{tpu_custom_call.1} parent=0
    _
  %s7 = ssub.s32 1, %s5
  %s8 = scalar_select 0, %s7, %s5
  $region1: #{tpu_custom_call.1} parent=0
    #allocation2 [shape = 'u8[4096]{0}', space=vmem, size = 0x1000, scoped, tag = 'input window, operand 0']
    #allocation3 [shape = 's32[2]{0}', space=sflag, size = 0x8, scoped, tag = 'scoped memory for tpu_custom_call.1']
    #allocation4 [shape = 's32[2]{0}', space=sflag, size = 0x8, scoped, tag = 'scoped memory for tpu_custom_call.1']
    #allocation5 [shape = 'u8[2048]{0}', space=vmem, size = 0x800, scoped, tag = 'input window, operand 1, single buffered']
    #allocation6 [shape = 's32[1]{0}', space=sflag, size = 0x4, scoped, tag = 'scoped memory for tpu_custom_call.1']
    #allocation7 [shape = 'u8[4096]{0}', space=vmem, size = 0x1000, scoped, tag = 'output window, operand 0']
    %9 = vsyncpa [#allocation3], 0
    %s10 = scalar_lea.sflag [#allocation3], 1
    %11 = vsyncpa %s10, 0
    %12 = vsyncpa [#allocation6], 0
    %13 = vsyncpa [#allocation4], 0
    %s14 = scalar_lea.sflag [#allocation4], 1
    %15 = vsyncpa %s14, 0
    loop: start=0, step=1, limit=4
    $region2: #{tpu_custom_call.1} parent=1 // loop_pre_header
      _
    $region3: #{tpu_custom_call.1} parent=1 // loop_header
      %s17 = sphi 0, %s21
      %p18 = scmp.ge.s32.totalorder %s17, 4
      %s24 = sphi 0, %s36
      %s25 = sphi 0, %s32
      %s26 = sphi 0, %s24
      %s27 = sphi 0, %s25
      %s28 = sphi 0, %s26
      %s29 = sphi 0, %s27
      %s41 = sphi 0, %s43
      %s44 = sphi 0, %s41
      %s45 = sphi 0, %s44
      %s61 = sphi 0, %s45
      %s67 = sphi 0, %s69
      %s70 = sphi 0, %s67
      %s71 = sphi 0, %s70
      %s87 = sphi 0, %s71
      %s91 = sphi 0, %s91
      %s93 = sphi 0, %s91
      %s94 = sphi 0, %s93
      %s108 = sphi 0, %s94
      %s112 = sphi 0, %s112
      %s114 = sphi 0, %s112
      %s115 = sphi 0, %s114
      %s129 = sphi 0, %s115
      %s137 = sphi 0, %s139
      %s140 = sphi 0, %s137
      %s141 = sphi 0, %s140
      %s157 = sphi 0, %s141
    $region4: #{tpu_custom_call.1} parent=1 // loop_header_branch
      %20 = sbr.rel (%p18) target = $region8
    $region5: #{tpu_custom_call.1} parent=1 // loop_body
      %s22 = ssub.s32 %s17, 1
      %s23 = ssub.s32 %s17, 2
      %s30 = sadd.s32 1, %s25
      %p31 = scmp.ge.s32.totalorder %s30, 1
      %s32 = scalar_select %p31, 0, %s30
      %s33 = sadd.s32 1, %s24
      %s34 = scalar_select %p31, %s33, %s24
      %p35 = scmp.ge.s32.totalorder %s34, 2
      %s36 = scalar_select %p35, 0, %s34
      %s37 = ssub.s32 %s24, %s36
      %s38 = ssub.s32 %s25, %s32
      %s39 = sor.u32 %s37, %s38
      %p40 = scmp.eq.s32.totalorder %s39, 0
      %s42 = sadd.s32 %s41, 1
      %s43 = scalar_select %p40, %s41, %s42
      %p46 = pneg %p40
      %p47 = scmp.eq.s32.totalorder %s17, 1
      %p48 = por %p46, %p47
      %p49 = scmp.ne.s32.totalorder %s41, %s44
      %p50 = scmp.eq.s32.totalorder %s17, 0
      %p51 = por %p49, %p50
      %p52 = scmp.ne.s32.totalorder %s41, %s44
      %p53 = scmp.eq.s32.totalorder %s22, 1
      %p54 = por %p52, %p53
      %p55 = scmp.ne.s32.totalorder %s44, %s45
      %p56 = scmp.eq.s32.totalorder %s22, 0
      %p57 = por %p55, %p56
      %p58 = scmp.ne.s32.totalorder %s44, %s45
      %p59 = scmp.eq.s32.totalorder %s23, 1
      %p60 = por %p58, %p59
      %p62 = scmp.ne.s32.totalorder %s45, %s61
      %p63 = scmp.eq.s32.totalorder %s23, 0
      %p64 = por %p62, %p63
      %s65 = ssub.s32 %s25, %s32
      %p66 = scmp.eq.s32.totalorder %s65, 0
      %s68 = sadd.s32 %s67, 1
      %s69 = scalar_select %p66, %s67, %s68
      %p72 = pneg %p66
      %p73 = scmp.eq.s32.totalorder %s17, 1
      %p74 = por %p72, %p73
      %p75 = scmp.ne.s32.totalorder %s67, %s70
      %p76 = scmp.eq.s32.totalorder %s17, 0
      %p77 = por %p75, %p76
      %p78 = scmp.ne.s32.totalorder %s67, %s70
      %p79 = scmp.eq.s32.totalorder %s22, 1
      %p80 = por %p78, %p79
      %p81 = scmp.ne.s32.totalorder %s70, %s71
      %p82 = scmp.eq.s32.totalorder %s22, 0
      %p83 = por %p81, %p82
      %p84 = scmp.ne.s32.totalorder %s70, %s71
      %p85 = scmp.eq.s32.totalorder %s23, 1
      %p86 = por %p84, %p85
      %p88 = scmp.ne.s32.totalorder %s71, %s87
      %p89 = scmp.eq.s32.totalorder %s23, 0
      %p90 = por %p88, %p89
      %s92 = sadd.s32 %s91, 1
      %p95 = scmp.eq.s32.totalorder %s17, 1
      %p96 = scmp.ne.s32.totalorder %s91, %s93
      %p97 = scmp.eq.s32.totalorder %s17, 0
      %p98 = por %p96, %p97
      %p99 = scmp.ne.s32.totalorder %s91, %s93
      %p100 = scmp.eq.s32.totalorder %s22, 1
      %p101 = por %p99, %p100
      %p102 = scmp.ne.s32.totalorder %s93, %s94
      %p103 = scmp.eq.s32.totalorder %s22, 0
      %p104 = por %p102, %p103
      %p105 = scmp.ne.s32.totalorder %s93, %s94
      %p106 = scmp.eq.s32.totalorder %s23, 1
      %p107 = por %p105, %p106
      %p109 = scmp.ne.s32.totalorder %s94, %s108
      %p110 = scmp.eq.s32.totalorder %s23, 0
      %p111 = por %p109, %p110
      %s113 = sadd.s32 %s112, 1
      %p116 = scmp.eq.s32.totalorder %s17, 1
      %p117 = scmp.ne.s32.totalorder %s112, %s114
      %p118 = scmp.eq.s32.totalorder %s17, 0
      %p119 = por %p117, %p118
      %p120 = scmp.ne.s32.totalorder %s112, %s114
      %p121 = scmp.eq.s32.totalorder %s22, 1
      %p122 = por %p120, %p121
      %p123 = scmp.ne.s32.totalorder %s114, %s115
      %p124 = scmp.eq.s32.totalorder %s22, 0
      %p125 = por %p123, %p124
      %p126 = scmp.ne.s32.totalorder %s114, %s115
      %p127 = scmp.eq.s32.totalorder %s23, 1
      %p128 = por %p126, %p127
      %p130 = scmp.ne.s32.totalorder %s115, %s129
      %p131 = scmp.eq.s32.totalorder %s23, 0
      %p132 = por %p130, %p131
      %s133 = ssub.s32 %s24, %s36
      %s134 = ssub.s32 %s25, %s32
      %s135 = sor.u32 %s133, %s134
      %p136 = scmp.eq.s32.totalorder %s135, 0
      %s138 = sadd.s32 %s137, 1
      %s139 = scalar_select %p136, %s137, %s138
      %p142 = pneg %p136
      %p143 = scmp.eq.s32.totalorder %s17, 1
      %p144 = por %p142, %p143
      %p145 = scmp.ne.s32.totalorder %s137, %s140
      %p146 = scmp.eq.s32.totalorder %s17, 0
      %p147 = por %p145, %p146
      %p148 = scmp.ne.s32.totalorder %s137, %s140
      %p149 = scmp.eq.s32.totalorder %s22, 1
      %p150 = por %p148, %p149
      %p151 = scmp.ne.s32.totalorder %s140, %s141
      %p152 = scmp.eq.s32.totalorder %s22, 0
      %p153 = por %p151, %p152
      %p154 = scmp.ne.s32.totalorder %s140, %s141
      %p155 = scmp.eq.s32.totalorder %s23, 1
      %p156 = por %p154, %p155
      %p158 = scmp.ne.s32.totalorder %s141, %s157
      %p159 = scmp.eq.s32.totalorder %s23, 0
      %p160 = por %p158, %p159
      %p161 = scmp.le.s32.totalorder 1, %s17
      %p162 = scmp.lt.s32.totalorder %s17, 3
      %p163 = pnand %p161, %p162
      %p164 = pneg %p163
      // Predicated region
      $region9: #{tpu_custom_call.1} parent=5 // pred_check
        _
      $region10: #{tpu_custom_call.1} parent=5 // pred_check_branch
        %166 = sbr.rel (%p163) target = $region12
      $region11: #{tpu_custom_call.1} parent=5 // pred_region
        %s167 = ssub.s32 %s17, 1
        // Predicated region
        $region13: #{tpu_custom_call.1} parent=11 // pred_check
          %p168 = pneg %p83
        $region14: #{tpu_custom_call.1} parent=11 // pred_check_branch
          %170 = sbr.rel (%p168) target = $region16
        $region15: #{tpu_custom_call.1} parent=11 // pred_region
          %s172 = ssub.s32 64, 64
          %173 = vsyncadd [#allocation6], %s172
          %s174 = smul.addr %s27, 64
          %s175 = scalar_lea.hbm %s1, %s174
          %s177 = sshll.u32 [#allocation5], 4
          %s178 = int_to_ptr.vmem [resolvable:$true] %s177
          %180 = dma.hbm_to_vmem [thread:$0]  %s175, 64, %s178, [#allocation6]
        $region16: #{tpu_custom_call.1} parent=11 // pred_fallthru
          _
        // Predicated region
        $region17: #{tpu_custom_call.1} parent=11 // pred_check
          %p181 = pneg %p104
        $region18: #{tpu_custom_call.1} parent=11 // pred_check_branch
          %183 = sbr.rel (%p181) target = $region20
        $region19: #{tpu_custom_call.1} parent=11 // pred_region
          _
        $region20: #{tpu_custom_call.1} parent=11 // pred_fallthru
          _
        // Predicated region
        $region21: #{tpu_custom_call.1} parent=11 // pred_check
          %p184 = pneg %p125
        $region22: #{tpu_custom_call.1} parent=11 // pred_check_branch
          %186 = sbr.rel (%p184) target = $region24
        $region23: #{tpu_custom_call.1} parent=11 // pred_region
          _
        $region24: #{tpu_custom_call.1} parent=11 // pred_fallthru
          _
      $region12: #{tpu_custom_call.1} parent=5 // pred_fallthru
        _
      %p187 = scmp.lt.s32.totalorder %s17, 2
      // Predicated region
      $region25: #{tpu_custom_call.1} parent=5 // pred_check
        %p188 = pneg %p187
      $region26: #{tpu_custom_call.1} parent=5 // pred_check_branch
        %190 = sbr.rel (%p188) target = $region28
      $region27: #{tpu_custom_call.1} parent=5 // pred_region
        // Predicated region
        $region29: #{tpu_custom_call.1} parent=27 // pred_check
          %p191 = pneg %p51
        $region30: #{tpu_custom_call.1} parent=27 // pred_check_branch
          %193 = sbr.rel (%p191) target = $region32
        $region31: #{tpu_custom_call.1} parent=27 // pred_region
          %s194 = sand.u32 %s41, 1
          %s195 = scalar_lea.sflag [#allocation3], %s194
          %s196 = sand.u32 %s41, 1
          %s197 = smul.addr %s196, 4
          %s198 = scalar_lea.vmem [#allocation2], %s197
          %s200 = ssub.s32 64, 64
          %201 = vsyncadd %s195, %s200
          %s202 = sadd.s32 %s25, %s24
          %s203 = smul.addr %s202, 64
          %s204 = scalar_lea.hbm %s0, %s203
          %s206 = sshll.u32 %s198, 4
          %s207 = int_to_ptr.vmem [resolvable:$true] %s206
          %209 = dma.hbm_to_vmem [thread:$0]  %s204, 64, %s207, %s195
        $region32: #{tpu_custom_call.1} parent=27 // pred_fallthru
          _
      $region28: #{tpu_custom_call.1} parent=5 // pred_fallthru
        _
      %p210 = scmp.le.s32.totalorder 1, %s17
      %p211 = scmp.lt.s32.totalorder %s17, 3
      %p212 = pnand %p210, %p211
      %p213 = pneg %p212
      // Predicated region
      $region33: #{tpu_custom_call.1} parent=5 // pred_check
        _
      $region34: #{tpu_custom_call.1} parent=5 // pred_check_branch
        %215 = sbr.rel (%p212) target = $region36
      $region35: #{tpu_custom_call.1} parent=5 // pred_region
        %s216 = ssub.s32 %s17, 1
        %s217 = sand.u32 %s44, 1
        %s218 = scalar_lea.sflag [#allocation3], %s217
        %s219 = sand.u32 %s44, 1
        %s220 = smul.addr %s219, 4
        %s221 = scalar_lea.vmem [#allocation2], %s220
        // Predicated region
        $region37: #{tpu_custom_call.1} parent=35 // pred_check
          %p222 = pneg %p57
        $region38: #{tpu_custom_call.1} parent=35 // pred_check_branch
          %224 = sbr.rel (%p222) target = $region40
        $region39: #{tpu_custom_call.1} parent=35 // pred_region
          %225 = dma.done %s218, 64
        $region40: #{tpu_custom_call.1} parent=35 // pred_fallthru
          _
        // Predicated region
        $region41: #{tpu_custom_call.1} parent=35 // pred_check
          %p226 = pneg %p83
        $region42: #{tpu_custom_call.1} parent=35 // pred_check_branch
          %228 = sbr.rel (%p226) target = $region44
        $region43: #{tpu_custom_call.1} parent=35 // pred_region
          %229 = dma.done [#allocation6], 64
        $region44: #{tpu_custom_call.1} parent=35 // pred_fallthru
          _
        %s230 = sand.u32 %s44, 1
        %s231 = scalar_lea.sflag [#allocation3], %s230
        %s232 = sand.u32 %s44, 1
        %s233 = smul.addr %s232, 4
        %s234 = scalar_lea.vmem [#allocation2], %s233
        %p235 = pneg %p57
        %p236 = pneg %p54
        %p237 = pneg %p83
        %p238 = pneg %p80
        %p239 = pneg %p104
        %p240 = pneg %p101
        %p241 = pneg %p125
        %p242 = pneg %p122
        %p243 = pneg %p153
        %p244 = pneg %p150
        %s245 = sand.u32 %s140, 1
        %s246 = scalar_lea.sflag [#allocation4], %s245
        %s247 = sand.u32 %s140, 1
        %s248 = smul.addr %s247, 4
        %s249 = scalar_lea.vmem [#allocation7], %s248
        %v250 = vld [vmem:[%s221] sm:$0xf]
        %v251 = vunpack.c.l.bf16 %v250
        %v252 = vld [vmem:[#allocation5] sm:$0xf]
        %v253 = vunpack.c.l.bf16 %v252
        %v254 = vadd.f32 %v251, %v253
        %v255 = vld [vmem:[%s2] sm:$0x1]
        %v256 = vld [vmem:[%s3] sm:$0x1]
        %vm257 = vcmask 261120
        %v258 = vsel %vm257, %v254, 0.0
        %259 = vadd.xlane.f32.xlu0 %v258
        %v260 = vpop.xlane.xlu0 %259
        %v261 = vrcp.pop 32.0
        %v262 = vmul.f32 %v260, %v261
        %v263 = vsub.f32 %v254, %v262
        %v264 = vmul.f32 %v263, %v263
        %v265 = vsel %vm257, %v264, 0.0
        %266 = vadd.xlane.f32.xlu0 %v265
        %v267 = vpop.xlane.xlu0 %266
        %v268 = vmul.f32 %v267, %v261
        %v269 = vadd.f32 %v268, 1e-12
        %v270 = vrsqrt.pop %v269
        %v271 = vmul.f32 %v263, %v270
        %v273 = vlaneseq
        %v274 = vshrl.u32 %v273, 7
        %v275 = vsub.s32 0, %v274
        %v276 = vrot.slane %v255, %v275
        %v278 = vmul.f32 %v271, %v276
        %v280 = vlaneseq
        %v281 = vshrl.u32 %v280, 7
        %v282 = vsub.s32 0, %v281
        %v283 = vrot.slane %v256, %v282
        %v285 = vadd.f32 %v278, %v283
        %v286 = vpack.c.bf16 %v285, %v285
        %vm287 = vcmask 257024
        %288 = vst.msk [vmem:[%s249] sm:$0xf] %vm287, %v286
        %s289 = sand.u32 %s140, 1
        %s290 = scalar_lea.sflag [#allocation4], %s289
        %s291 = sand.u32 %s140, 1
        %s292 = smul.addr %s291, 4
        %s293 = scalar_lea.vmem [#allocation7], %s292
        // Predicated region
        $region45: #{tpu_custom_call.1} parent=35 // pred_check
          %p294 = pneg %p150
        $region46: #{tpu_custom_call.1} parent=35 // pred_check_branch
          %296 = sbr.rel (%p294) target = $region48
        $region47: #{tpu_custom_call.1} parent=35 // pred_region
          %s298 = ssub.s32 64, 64
          %299 = vsyncadd %s290, %s298
          %s300 = sadd.s32 %s27, %s26
          %s301 = smul.addr %s300, 64
          %s302 = scalar_lea.hbm %s4, %s301
          %s304 = sshll.u32 %s293, 4
          %s305 = int_to_ptr.vmem [resolvable:$true] %s304
          %307 = dma.vmem_to_hbm [thread:$0]  %s305, 64, %s302, %s290
        $region48: #{tpu_custom_call.1} parent=35 // pred_fallthru
          _
      $region36: #{tpu_custom_call.1} parent=5 // pred_fallthru
        _
      %p308 = scmp.le.s32.totalorder 2, %s17
      // Predicated region
      $region49: #{tpu_custom_call.1} parent=5 // pred_check
        %p309 = pneg %p308
      $region50: #{tpu_custom_call.1} parent=5 // pred_check_branch
        %311 = sbr.rel (%p309) target = $region52
      $region51: #{tpu_custom_call.1} parent=5 // pred_region
        %s312 = ssub.s32 %s17, 2
        // Predicated region
        $region53: #{tpu_custom_call.1} parent=51 // pred_check
          %p313 = pneg %p156
        $region54: #{tpu_custom_call.1} parent=51 // pred_check_branch
          %315 = sbr.rel (%p313) target = $region56
        $region55: #{tpu_custom_call.1} parent=51 // pred_region
          %s316 = sand.u32 %s141, 1
          %s317 = scalar_lea.sflag [#allocation4], %s316
          %s318 = sand.u32 %s141, 1
          %s319 = smul.addr %s318, 4
          %s320 = scalar_lea.vmem [#allocation7], %s319
          %321 = dma.done %s317, 64
        $region56: #{tpu_custom_call.1} parent=51 // pred_fallthru
          _
      $region52: #{tpu_custom_call.1} parent=5 // pred_fallthru
        _
    $region6: #{tpu_custom_call.1} parent=1 // loop_footer
      %s21 = sadd.s32 1, %s17
    $region7: #{tpu_custom_call.1} parent=1 // loop_footer_branch
      %16 = sbr.rel target = $region3
    $region8: #{tpu_custom_call.1} parent=1 // loop_exit
      _
    %322 = vsyncpa [#allocation3], 1
    %s323 = scalar_lea.sflag [#allocation3], 1
    %324 = vsyncpa %s323, 1
    %325 = vsyncpa [#allocation6], 1
    %326 = vsyncpa [#allocation4], 1
    %s327 = scalar_lea.sflag [#allocation4], 1
    %328 = vsyncpa %s327, 1

</llo_original>
